<compile_context>
chip_gen: v5e
topology: v5e:2x2
jax: 0.10.0
libtpu: 0.0.40
codegen_flags: <defaults>
</compile_context>

<pallas_src>
import math
import jax
import jax.numpy as jnp
from jax import lax
from jax.experimental import pallas as pl
from jax.experimental.pallas import tpu as pltpu

EPS = 1e-5                      # torch.nn.LayerNorm default eps
_SQRT1_2 = 0.7071067811865476

# row indices of the packed (8, E) vector bundle
_BEMB, _BO, _G1, _BE1, _B2, _G2, _BE2 = range(7)


def _layernorm(x, gamma, beta):
    mu = jnp.mean(x, axis=-1, keepdims=True)
    xc = x - mu
    var = jnp.mean(xc * xc, axis=-1, keepdims=True)
    return xc * lax.rsqrt(var + EPS) * gamma + beta


def _gelu_exact(x):
    # matches torch.nn.GELU() (erf form, approximate='none')
    return 0.5 * x * (1.0 + lax.erf(x * _SQRT1_2))


def make_kernel(BB, P, C, E, H, F, use_mask):
    D = E // H
    R = BB * P

    def kernel(x_ref, wemb_ref, pos_ref, wqkv_ref, bqkv_ref, wo_ref,
               w1_ref, b1_ref, w2_ref, vec_ref, *rest):
        if use_mask:
            mask_ref, out_ref = rest
            mask_bias = mask_ref[...]                                  # (R, R)
        else:
            (out_ref,) = rest
            mask_bias = None

        x = x_ref[0]                                                   # (R, C)

        bemb = vec_ref[_BEMB:_BEMB + 1, :]
        bo   = vec_ref[_BO:_BO + 1, :]
        g1   = vec_ref[_G1:_G1 + 1, :]
        be1  = vec_ref[_BE1:_BE1 + 1, :]
        b2   = vec_ref[_B2:_B2 + 1, :]
        g2   = vec_ref[_G2:_G2 + 1, :]
        be2  = vec_ref[_BE2:_BE2 + 1, :]

        # patch embedding + positional embedding (pos pre-tiled to R rows)
        h = jnp.dot(x, wemb_ref[...], preferred_element_type=jnp.float32) + bemb
        h = h + pos_ref[...]                                           # (R, E)

        # fused Q/K/V projection; 1/sqrt(D) is already folded into Q cols/bias
        qkv = jnp.dot(h, wqkv_ref[...],
                      preferred_element_type=jnp.float32) + bqkv_ref[...]   # (R, 3E)

        # ---- multi-head self-attention (dropout = identity in eval) ----
        attn = jnp.zeros((R, E), jnp.float32)
        for hh in range(H):                                            # static unroll over heads
            lo = hh * D
            qh = qkv[:, lo:lo + D]                                     # (R, D)
            kh = qkv[:, E + lo:E + lo + D]
            vh = qkv[:, 2 * E + lo:2 * E + lo + D]
            s = lax.dot_general(qh, kh, (((1,), (1,)), ((), ())),
                                preferred_element_type=jnp.float32)    # (R, R)
            if mask_bias is not None:
                s = s + mask_bias                                      # block-diag per sequence
            s = s - jnp.max(s, axis=-1, keepdims=True)
            e = jnp.exp(s)
            p = e * pl.reciprocal(jnp.sum(e, axis=-1, keepdims=True), approx=True)
            oh = jnp.dot(p, vh, preferred_element_type=jnp.float32)    # (R, D)
            # fold out-projection per head (sublane-aligned weight slice)
            attn = attn + jnp.dot(oh, wo_ref[lo:lo + D, :],
                                  preferred_element_type=jnp.float32)  # (R, E)
        attn = attn + bo

        h1 = _layernorm(h + attn, g1, be1)                             # (R, E)

        # ---- FFN (dropout = identity) ----
        f = jnp.dot(h1, w1_ref[...], preferred_element_type=jnp.float32) + b1_ref[...]
        f = _gelu_exact(f)
        f = jnp.dot(f, w2_ref[...], preferred_element_type=jnp.float32) + b2

        out_ref[0] = _layernorm(h1 + f, g2, be2)

    return kernel


def _choose_batch_block(B, P, target_rows=128):
    # Smallest divisor of B whose block reaches ~target_rows MXU rows; this
    # keeps as many parallel grid steps as possible (v7x has 2 TensorCores).
    # If no divisor reaches it (tiny B*P, e.g. the demo's 2*8 = 16 rows), fuse
    # the whole batch into one step -- amortizing the ~0.35us/step overhead
    # outweighs idle-TC concerns at that size.
    for d in range(1, B + 1):
        if B % d == 0 and d * P >= target_rows:
            return d
    return B


def init_params(key, C, P, E, H, F):
    """Deterministic synthetic parameters, stored in PyTorch layout (out, in)."""
    ks = jax.random.split(key, 16)

    def w(k, shape, s=0.05):
        return jax.random.normal(k, shape, jnp.float32) * s

    return dict(
        wemb=w(ks[0], (E, C)),
        bemb=w(ks[1], (E,), 0.02),
        pos=jax.random.normal(ks[2], (1, P, E), jnp.float32) * 0.02,
        in_proj_w=w(ks[3], (3 * E, E)),
        in_proj_b=w(ks[4], (3 * E,), 0.02),
        wo=w(ks[5], (E, E)),
        bo=w(ks[6], (E,), 0.02),
        g1=jnp.ones((E,), jnp.float32) + w(ks[7], (E,), 0.01),
        be1=w(ks[8], (E,), 0.01),
        w1=w(ks[9], (F, E)),
        b1=w(ks[10], (F,), 0.02),
        w2=w(ks[11], (E, F)),
        b2=w(ks[12], (E,), 0.02),
        g2=jnp.ones((E,), jnp.float32) + w(ks[13], (E,), 0.01),
        be2=w(ks[14], (E,), 0.01),
    )


def patch_attention_forward(x, params, num_heads):
    B_, P_, C_ = x.shape
    E_ = params["wemb"].shape[0]
    F_ = params["w1"].shape[0]
    D_ = E_ // num_heads
    scale = 1.0 / math.sqrt(D_)

    BB = _choose_batch_block(B_, P_)
    NB = B_ // BB
    R = BB * P_
    use_mask = BB > 1

    # ---- parameter prep: all weights pre-transposed to (in, out) ----
    # fused QKV weight/bias with the softmax scale folded into the Q part
    wq = params["in_proj_w"][:E_].T * scale
    wk = params["in_proj_w"][E_:2 * E_].T
    wv = params["in_proj_w"][2 * E_:].T
    wqkv = jnp.concatenate([wq, wk, wv], axis=1)                       # (E, 3E)
    bqkv = jnp.concatenate([params["in_proj_b"][:E_] * scale,
                            params["in_proj_b"][E_:]]).reshape(1, 3 * E_)

    pos_tiled = jnp.tile(params["pos"][0], (BB, 1))                    # (R, E)

    # pack the replicated E-wide vectors into one input (rows indexed in-kernel)
    vecs = jnp.stack([params["bemb"], params["bo"],
                      params["g1"], params["be1"],
                      params["b2"], params["g2"], params["be2"],
                      jnp.zeros((E_,), jnp.float32)], axis=0)          # (8, E)

    x_blk = x.reshape(NB, R, C_)

    args = [x_blk,
            params["wemb"].T, pos_tiled, wqkv, bqkv,
            params["wo"].T,
            params["w1"].T, params["b1"].reshape(1, F_), params["w2"].T,
            vecs]

    if use_mask:
        seq = jnp.arange(R) // P_
        mask_bias = jnp.where(seq[:, None] == seq[None, :],
                              0.0, -1e30).astype(jnp.float32)          # (R, R)
        args.append(mask_bias)

    def rep(a):  # whole array, replicated across the grid
        nd = a.ndim
        return pl.BlockSpec(a.shape, lambda nb, nd=nd: (0,) * nd)

    in_specs = ([pl.BlockSpec((1, R, C_), lambda nb: (nb, 0, 0))]
                + [rep(a) for a in args[1:]])

    kernel = make_kernel(BB, P_, C_, E_, num_heads, F_, use_mask)

    out = pl.pallas_call(
        kernel,
        out_shape=jax.ShapeDtypeStruct((NB, R, E_), jnp.float32),
        grid=(NB,),
        in_specs=in_specs,
        out_specs=pl.BlockSpec((1, R, E_), lambda nb: (nb, 0, 0)),
        compiler_params=pltpu.CompilerParams(dimension_semantics=("parallel",)),
    )(*args)

    # lane layout untouched in-kernel; cheap wrapper-side reshape back to (B,P,E)
    return out.reshape(B_, P_, E_)


def reference_forward(x, params, num_heads):
    """Pure-JAX replica of the PyTorch forward (eval mode) for validation."""
    E_ = params["wemb"].shape[0]
    B_, P_, _ = x.shape
    D_ = E_ // num_heads

    h = x @ params["wemb"].T + params["bemb"]
    h = h + params["pos"]

    q = h @ params["in_proj_w"][:E_].T + params["in_proj_b"][:E_]
    k = h @ params["in_proj_w"][E_:2 * E_].T + params["in_proj_b"][E_:2 * E_]
    v = h @ params["in_proj_w"][2 * E_:].T + params["in_proj_b"][2 * E_:]

    qh = q.reshape(B_, P_, num_heads, D_)
    kh = k.reshape(B_, P_, num_heads, D_)
    vh = v.reshape(B_, P_, num_heads, D_)
    s = jnp.einsum("bqhd,bkhd->bhqk", qh, kh) / math.sqrt(D_)
    p = jax.nn.softmax(s, axis=-1)
    o = jnp.einsum("bhqk,bkhd->bqhd", p, vh).reshape(B_, P_, E_)
    attn = o @ params["wo"].T + params["bo"]

    def ln(y, g, b):
        mu = y.mean(-1, keepdims=True)
        var = ((y - mu) ** 2).mean(-1, keepdims=True)
        return (y - mu) / jnp.sqrt(var + EPS) * g + b

    h1 = ln(h + attn, params["g1"], params["be1"])
    f = h1 @ params["w1"].T + params["b1"]
    f = 0.5 * f * (1.0 + lax.erf(f * _SQRT1_2))
    f = f @ params["w2"].T + params["b2"]
    return ln(h1 + f, params["g2"], params["be2"])


if __name__ == "__main__":
    B, P, C = 2, 8, 4          # batch, num_patches, channels
    E, H, F = 32, 4, 64        # embed_dim, num_heads, ffn_dim

    key = jax.random.PRNGKey(0)
    kx, kp = jax.random.split(key)
    x = jax.random.normal(kx, (B, P, C), jnp.float32)
    params = init_params(kp, C, P, E, H, F)

    out = patch_attention_forward(x, params, H)
    out = jax.block_until_ready(out)

    ref = reference_forward(x, params, H)
    assert out.shape == (B, P, E), out.shape
    max_err = float(jnp.max(jnp.abs(out - ref)))
    # only approximation vs the exact reference is the EUP approx-reciprocal
    # in the softmax denominator
    assert max_err < 2e-2, f"mismatch vs reference: {max_err}"
    print("KERNEL_OK")
</pallas_src>

<mosaic_0001>
module attributes {stable_mosaic.version = 11 : i64} {
  func.func @kernel(%arg0: i32, %arg1: memref<1x16x4xf32, #tpu.memory_space<vmem>>, %arg2: memref<4x32xf32, #tpu.memory_space<vmem>>, %arg3: memref<16x32xf32, #tpu.memory_space<vmem>>, %arg4: memref<32x96xf32, #tpu.memory_space<vmem>>, %arg5: memref<1x96xf32, #tpu.memory_space<vmem>>, %arg6: memref<32x32xf32, #tpu.memory_space<vmem>>, %arg7: memref<32x64xf32, #tpu.memory_space<vmem>>, %arg8: memref<1x64xf32, #tpu.memory_space<vmem>>, %arg9: memref<64x32xf32, #tpu.memory_space<vmem>>, %arg10: memref<8x32xf32, #tpu.memory_space<vmem>>, %arg11: memref<16x16xf32, #tpu.memory_space<vmem>>, %arg12: memref<1x16x32xf32, #tpu.memory_space<vmem>>) attributes {dimension_semantics = [#tpu.dimension_semantics<parallel>], iteration_bounds = array<i64: 1>, scalar_prefetch = 0 : i64, scratch_operands = 0 : i64, tpu.core_type = #tpu.core_type<tc>, window_params = [{transform_indices = @transform_0, window_bounds = array<i64: 1, 16, 4>}, {pipeline_mode = #tpu.pipeline_mode<synchronous>, transform_indices = @transform_1, window_bounds = array<i64: 4, 32>}, {pipeline_mode = #tpu.pipeline_mode<synchronous>, transform_indices = @transform_2, window_bounds = array<i64: 16, 32>}, {pipeline_mode = #tpu.pipeline_mode<synchronous>, transform_indices = @transform_3, window_bounds = array<i64: 32, 96>}, {pipeline_mode = #tpu.pipeline_mode<synchronous>, transform_indices = @transform_4, window_bounds = array<i64: 1, 96>}, {pipeline_mode = #tpu.pipeline_mode<synchronous>, transform_indices = @transform_5, window_bounds = array<i64: 32, 32>}, {pipeline_mode = #tpu.pipeline_mode<synchronous>, transform_indices = @transform_6, window_bounds = array<i64: 32, 64>}, {pipeline_mode = #tpu.pipeline_mode<synchronous>, transform_indices = @transform_7, window_bounds = array<i64: 1, 64>}, {pipeline_mode = #tpu.pipeline_mode<synchronous>, transform_indices = @transform_8, window_bounds = array<i64: 64, 32>}, {pipeline_mode = #tpu.pipeline_mode<synchronous>, transform_indices = @transform_9, window_bounds = array<i64: 8, 32>}, {pipeline_mode = #tpu.pipeline_mode<synchronous>, transform_indices = @transform_10, window_bounds = array<i64: 16, 16>}, {transform_indices = @transform_11, window_bounds = array<i64: 1, 16, 32>}]} {
    %c0 = arith.constant 0 : index
    %c0_0 = arith.constant 0 : index
    %0 = vector.load %arg11[%c0, %c0_0] : memref<16x16xf32, #tpu.memory_space<vmem>>, vector<16x16xf32>
    %c0_1 = arith.constant 0 : index
    %c0_2 = arith.constant 0 : index
    %c0_3 = arith.constant 0 : index
    %1 = vector.load %arg1[%c0_1, %c0_2, %c0_3] : memref<1x16x4xf32, #tpu.memory_space<vmem>>, vector<1x16x4xf32>
    %2 = vector.shape_cast %1 : vector<1x16x4xf32> to vector<16x4xf32>
    %c0_4 = arith.constant 0 : index
    %c0_5 = arith.constant 0 : index
    %3 = vector.load %arg10[%c0_4, %c0_5] : memref<8x32xf32, #tpu.memory_space<vmem>>, vector<1x32xf32>
    %c1 = arith.constant 1 : index
    %c0_6 = arith.constant 0 : index
    %4 = vector.load %arg10[%c1, %c0_6] : memref<8x32xf32, #tpu.memory_space<vmem>>, vector<1x32xf32>
    %c2 = arith.constant 2 : index
    %c0_7 = arith.constant 0 : index
    %5 = vector.load %arg10[%c2, %c0_7] : memref<8x32xf32, #tpu.memory_space<vmem>>, vector<1x32xf32>
    %c3 = arith.constant 3 : index
    %c0_8 = arith.constant 0 : index
    %6 = vector.load %arg10[%c3, %c0_8] : memref<8x32xf32, #tpu.memory_space<vmem>>, vector<1x32xf32>
    %c4 = arith.constant 4 : index
    %c0_9 = arith.constant 0 : index
    %7 = vector.load %arg10[%c4, %c0_9] : memref<8x32xf32, #tpu.memory_space<vmem>>, vector<1x32xf32>
    %c5 = arith.constant 5 : index
    %c0_10 = arith.constant 0 : index
    %8 = vector.load %arg10[%c5, %c0_10] : memref<8x32xf32, #tpu.memory_space<vmem>>, vector<1x32xf32>
    %c6 = arith.constant 6 : index
    %c0_11 = arith.constant 0 : index
    %9 = vector.load %arg10[%c6, %c0_11] : memref<8x32xf32, #tpu.memory_space<vmem>>, vector<1x32xf32>
    %c0_12 = arith.constant 0 : index
    %c0_13 = arith.constant 0 : index
    %10 = vector.load %arg2[%c0_12, %c0_13] : memref<4x32xf32, #tpu.memory_space<vmem>>, vector<4x32xf32>
    %cst = arith.constant dense<0.000000e+00> : vector<16x32xf32>
    %11 = tpu.matmul %2, %10, %cst {dimension_numbers = #tpu.dot_dimension_numbers<[1], [0], [0], [1], [0, 0, 1, 1], [], []>} : vector<16x4xf32>, vector<4x32xf32>, vector<16x32xf32> -> vector<16x32xf32>
    %12 = vector.broadcast %3 : vector<1x32xf32> to vector<16x32xf32>
    %13 = arith.addf %11, %12 : vector<16x32xf32>
    %c0_14 = arith.constant 0 : index
    %c0_15 = arith.constant 0 : index
    %14 = vector.load %arg3[%c0_14, %c0_15] : memref<16x32xf32, #tpu.memory_space<vmem>>, vector<16x32xf32>
    %15 = arith.addf %13, %14 : vector<16x32xf32>
    %c0_16 = arith.constant 0 : index
    %c0_17 = arith.constant 0 : index
    %16 = vector.load %arg4[%c0_16, %c0_17] : memref<32x96xf32, #tpu.memory_space<vmem>>, vector<32x96xf32>
    %cst_18 = arith.constant dense<0.000000e+00> : vector<16x96xf32>
    %17 = tpu.matmul %15, %16, %cst_18 {dimension_numbers = #tpu.dot_dimension_numbers<[1], [0], [0], [1], [0, 0, 1, 1], [], []>} : vector<16x32xf32>, vector<32x96xf32>, vector<16x96xf32> -> vector<16x96xf32>
    %c0_19 = arith.constant 0 : index
    %c0_20 = arith.constant 0 : index
    %18 = vector.load %arg5[%c0_19, %c0_20] : memref<1x96xf32, #tpu.memory_space<vmem>>, vector<1x96xf32>
    %19 = vector.broadcast %18 : vector<1x96xf32> to vector<16x96xf32>
    %20 = arith.addf %17, %19 : vector<16x96xf32>
    %cst_21 = arith.constant 0.000000e+00 : f32
    %21 = vector.broadcast %cst_21 : f32 to vector<16x32xf32>
    %22 = vector.extract_strided_slice %20 {offsets = [0, 0], sizes = [16, 8], strides = [1, 1]} : vector<16x96xf32> to vector<16x8xf32>
    %23 = vector.extract_strided_slice %20 {offsets = [0, 32], sizes = [16, 8], strides = [1, 1]} : vector<16x96xf32> to vector<16x8xf32>
    %24 = vector.extract_strided_slice %20 {offsets = [0, 64], sizes = [16, 8], strides = [1, 1]} : vector<16x96xf32> to vector<16x8xf32>
    %cst_22 = arith.constant dense<0.000000e+00> : vector<16x16xf32>
    %25 = tpu.matmul %22, %23, %cst_22 {dimension_numbers = #tpu.dot_dimension_numbers<[1], [1], [0], [0], [0, 0, 1, 0], [], []>} : vector<16x8xf32>, vector<16x8xf32>, vector<16x16xf32> -> vector<16x16xf32>
    %26 = arith.addf %25, %0 : vector<16x16xf32>
    %cst_23 = arith.constant dense<0xFF800000> : vector<16xf32>
    %27 = vector.multi_reduction <maximumf>, %26, %cst_23 [1] : vector<16x16xf32> to vector<16xf32>
    %28 = vector.shape_cast %27 : vector<16xf32> to vector<16x1xf32>
    %29 = vector.broadcast %28 : vector<16x1xf32> to vector<16x16xf32>
    %30 = arith.subf %26, %29 : vector<16x16xf32>
    %31 = math.exp %30 : vector<16x16xf32>
    %cst_24 = arith.constant dense<0.000000e+00> : vector<16xf32>
    %32 = vector.multi_reduction <add>, %31, %cst_24 [1] : vector<16x16xf32> to vector<16xf32>
    %33 = vector.shape_cast %32 : vector<16xf32> to vector<16x1xf32>
    %34 = tpu.reciprocal %33 {approx = true} : vector<16x1xf32> -> vector<16x1xf32>
    %35 = vector.broadcast %34 : vector<16x1xf32> to vector<16x16xf32>
    %36 = arith.mulf %31, %35 : vector<16x16xf32>
    %cst_25 = arith.constant dense<0.000000e+00> : vector<16x8xf32>
    %37 = tpu.matmul %36, %24, %cst_25 {dimension_numbers = #tpu.dot_dimension_numbers<[1], [0], [0], [1], [0, 0, 1, 1], [], []>} : vector<16x16xf32>, vector<16x8xf32>, vector<16x8xf32> -> vector<16x8xf32>
    %c0_26 = arith.constant 0 : index
    %c0_27 = arith.constant 0 : index
    %38 = vector.load %arg6[%c0_26, %c0_27] : memref<32x32xf32, #tpu.memory_space<vmem>>, vector<8x32xf32>
    %cst_28 = arith.constant dense<0.000000e+00> : vector<16x32xf32>
    %39 = tpu.matmul %37, %38, %cst_28 {dimension_numbers = #tpu.dot_dimension_numbers<[1], [0], [0], [1], [0, 0, 1, 1], [], []>} : vector<16x8xf32>, vector<8x32xf32>, vector<16x32xf32> -> vector<16x32xf32>
    %40 = arith.addf %21, %39 : vector<16x32xf32>
    %41 = vector.extract_strided_slice %20 {offsets = [0, 8], sizes = [16, 8], strides = [1, 1]} : vector<16x96xf32> to vector<16x8xf32>
    %42 = vector.extract_strided_slice %20 {offsets = [0, 40], sizes = [16, 8], strides = [1, 1]} : vector<16x96xf32> to vector<16x8xf32>
    %43 = vector.extract_strided_slice %20 {offsets = [0, 72], sizes = [16, 8], strides = [1, 1]} : vector<16x96xf32> to vector<16x8xf32>
    %cst_29 = arith.constant dense<0.000000e+00> : vector<16x16xf32>
    %44 = tpu.matmul %41, %42, %cst_29 {dimension_numbers = #tpu.dot_dimension_numbers<[1], [1], [0], [0], [0, 0, 1, 0], [], []>} : vector<16x8xf32>, vector<16x8xf32>, vector<16x16xf32> -> vector<16x16xf32>
    %45 = arith.addf %44, %0 : vector<16x16xf32>
    %cst_30 = arith.constant dense<0xFF800000> : vector<16xf32>
    %46 = vector.multi_reduction <maximumf>, %45, %cst_30 [1] : vector<16x16xf32> to vector<16xf32>
    %47 = vector.shape_cast %46 : vector<16xf32> to vector<16x1xf32>
    %48 = vector.broadcast %47 : vector<16x1xf32> to vector<16x16xf32>
    %49 = arith.subf %45, %48 : vector<16x16xf32>
    %50 = math.exp %49 : vector<16x16xf32>
    %cst_31 = arith.constant dense<0.000000e+00> : vector<16xf32>
    %51 = vector.multi_reduction <add>, %50, %cst_31 [1] : vector<16x16xf32> to vector<16xf32>
    %52 = vector.shape_cast %51 : vector<16xf32> to vector<16x1xf32>
    %53 = tpu.reciprocal %52 {approx = true} : vector<16x1xf32> -> vector<16x1xf32>
    %54 = vector.broadcast %53 : vector<16x1xf32> to vector<16x16xf32>
    %55 = arith.mulf %50, %54 : vector<16x16xf32>
    %cst_32 = arith.constant dense<0.000000e+00> : vector<16x8xf32>
    %56 = tpu.matmul %55, %43, %cst_32 {dimension_numbers = #tpu.dot_dimension_numbers<[1], [0], [0], [1], [0, 0, 1, 1], [], []>} : vector<16x16xf32>, vector<16x8xf32>, vector<16x8xf32> -> vector<16x8xf32>
    %c8 = arith.constant 8 : index
    %c0_33 = arith.constant 0 : index
    %57 = vector.load %arg6[%c8, %c0_33] : memref<32x32xf32, #tpu.memory_space<vmem>>, vector<8x32xf32>
    %cst_34 = arith.constant dense<0.000000e+00> : vector<16x32xf32>
    %58 = tpu.matmul %56, %57, %cst_34 {dimension_numbers = #tpu.dot_dimension_numbers<[1], [0], [0], [1], [0, 0, 1, 1], [], []>} : vector<16x8xf32>, vector<8x32xf32>, vector<16x32xf32> -> vector<16x32xf32>
    %59 = arith.addf %40, %58 : vector<16x32xf32>
    %60 = vector.extract_strided_slice %20 {offsets = [0, 16], sizes = [16, 8], strides = [1, 1]} : vector<16x96xf32> to vector<16x8xf32>
    %61 = vector.extract_strided_slice %20 {offsets = [0, 48], sizes = [16, 8], strides = [1, 1]} : vector<16x96xf32> to vector<16x8xf32>
    %62 = vector.extract_strided_slice %20 {offsets = [0, 80], sizes = [16, 8], strides = [1, 1]} : vector<16x96xf32> to vector<16x8xf32>
    %cst_35 = arith.constant dense<0.000000e+00> : vector<16x16xf32>
    %63 = tpu.matmul %60, %61, %cst_35 {dimension_numbers = #tpu.dot_dimension_numbers<[1], [1], [0], [0], [0, 0, 1, 0], [], []>} : vector<16x8xf32>, vector<16x8xf32>, vector<16x16xf32> -> vector<16x16xf32>
    %64 = arith.addf %63, %0 : vector<16x16xf32>
    %cst_36 = arith.constant dense<0xFF800000> : vector<16xf32>
    %65 = vector.multi_reduction <maximumf>, %64, %cst_36 [1] : vector<16x16xf32> to vector<16xf32>
    %66 = vector.shape_cast %65 : vector<16xf32> to vector<16x1xf32>
    %67 = vector.broadcast %66 : vector<16x1xf32> to vector<16x16xf32>
    %68 = arith.subf %64, %67 : vector<16x16xf32>
    %69 = math.exp %68 : vector<16x16xf32>
    %cst_37 = arith.constant dense<0.000000e+00> : vector<16xf32>
    %70 = vector.multi_reduction <add>, %69, %cst_37 [1] : vector<16x16xf32> to vector<16xf32>
    %71 = vector.shape_cast %70 : vector<16xf32> to vector<16x1xf32>
    %72 = tpu.reciprocal %71 {approx = true} : vector<16x1xf32> -> vector<16x1xf32>
    %73 = vector.broadcast %72 : vector<16x1xf32> to vector<16x16xf32>
    %74 = arith.mulf %69, %73 : vector<16x16xf32>
    %cst_38 = arith.constant dense<0.000000e+00> : vector<16x8xf32>
    %75 = tpu.matmul %74, %62, %cst_38 {dimension_numbers = #tpu.dot_dimension_numbers<[1], [0], [0], [1], [0, 0, 1, 1], [], []>} : vector<16x16xf32>, vector<16x8xf32>, vector<16x8xf32> -> vector<16x8xf32>
    %c16 = arith.constant 16 : index
    %c0_39 = arith.constant 0 : index
    %76 = vector.load %arg6[%c16, %c0_39] : memref<32x32xf32, #tpu.memory_space<vmem>>, vector<8x32xf32>
    %cst_40 = arith.constant dense<0.000000e+00> : vector<16x32xf32>
    %77 = tpu.matmul %75, %76, %cst_40 {dimension_numbers = #tpu.dot_dimension_numbers<[1], [0], [0], [1], [0, 0, 1, 1], [], []>} : vector<16x8xf32>, vector<8x32xf32>, vector<16x32xf32> -> vector<16x32xf32>
    %78 = arith.addf %59, %77 : vector<16x32xf32>
    %79 = vector.extract_strided_slice %20 {offsets = [0, 24], sizes = [16, 8], strides = [1, 1]} : vector<16x96xf32> to vector<16x8xf32>
    %80 = vector.extract_strided_slice %20 {offsets = [0, 56], sizes = [16, 8], strides = [1, 1]} : vector<16x96xf32> to vector<16x8xf32>
    %81 = vector.extract_strided_slice %20 {offsets = [0, 88], sizes = [16, 8], strides = [1, 1]} : vector<16x96xf32> to vector<16x8xf32>
    %cst_41 = arith.constant dense<0.000000e+00> : vector<16x16xf32>
    %82 = tpu.matmul %79, %80, %cst_41 {dimension_numbers = #tpu.dot_dimension_numbers<[1], [1], [0], [0], [0, 0, 1, 0], [], []>} : vector<16x8xf32>, vector<16x8xf32>, vector<16x16xf32> -> vector<16x16xf32>
    %83 = arith.addf %82, %0 : vector<16x16xf32>
    %cst_42 = arith.constant dense<0xFF800000> : vector<16xf32>
    %84 = vector.multi_reduction <maximumf>, %83, %cst_42 [1] : vector<16x16xf32> to vector<16xf32>
    %85 = vector.shape_cast %84 : vector<16xf32> to vector<16x1xf32>
    %86 = vector.broadcast %85 : vector<16x1xf32> to vector<16x16xf32>
    %87 = arith.subf %83, %86 : vector<16x16xf32>
    %88 = math.exp %87 : vector<16x16xf32>
    %cst_43 = arith.constant dense<0.000000e+00> : vector<16xf32>
    %89 = vector.multi_reduction <add>, %88, %cst_43 [1] : vector<16x16xf32> to vector<16xf32>
    %90 = vector.shape_cast %89 : vector<16xf32> to vector<16x1xf32>
    %91 = tpu.reciprocal %90 {approx = true} : vector<16x1xf32> -> vector<16x1xf32>
    %92 = vector.broadcast %91 : vector<16x1xf32> to vector<16x16xf32>
    %93 = arith.mulf %88, %92 : vector<16x16xf32>
    %cst_44 = arith.constant dense<0.000000e+00> : vector<16x8xf32>
    %94 = tpu.matmul %93, %81, %cst_44 {dimension_numbers = #tpu.dot_dimension_numbers<[1], [0], [0], [1], [0, 0, 1, 1], [], []>} : vector<16x16xf32>, vector<16x8xf32>, vector<16x8xf32> -> vector<16x8xf32>
    %c24 = arith.constant 24 : index
    %c0_45 = arith.constant 0 : index
    %95 = vector.load %arg6[%c24, %c0_45] : memref<32x32xf32, #tpu.memory_space<vmem>>, vector<8x32xf32>
    %cst_46 = arith.constant dense<0.000000e+00> : vector<16x32xf32>
    %96 = tpu.matmul %94, %95, %cst_46 {dimension_numbers = #tpu.dot_dimension_numbers<[1], [0], [0], [1], [0, 0, 1, 1], [], []>} : vector<16x8xf32>, vector<8x32xf32>, vector<16x32xf32> -> vector<16x32xf32>
    %97 = arith.addf %78, %96 : vector<16x32xf32>
    %98 = vector.broadcast %4 : vector<1x32xf32> to vector<16x32xf32>
    %99 = arith.addf %97, %98 : vector<16x32xf32>
    %100 = arith.addf %15, %99 : vector<16x32xf32>
    %cst_47 = arith.constant dense<0.000000e+00> : vector<16xf32>
    %101 = vector.multi_reduction <add>, %100, %cst_47 [1] : vector<16x32xf32> to vector<16xf32>
    %102 = vector.shape_cast %101 : vector<16xf32> to vector<16x1xf32>
    %cst_48 = arith.constant 3.200000e+01 : f32
    %103 = vector.broadcast %cst_48 : f32 to vector<16x1xf32>
    %104 = arith.divf %102, %103 : vector<16x1xf32>
    %105 = vector.broadcast %104 : vector<16x1xf32> to vector<16x32xf32>
    %106 = arith.subf %100, %105 : vector<16x32xf32>
    %107 = arith.mulf %106, %106 : vector<16x32xf32>
    %cst_49 = arith.constant dense<0.000000e+00> : vector<16xf32>
    %108 = vector.multi_reduction <add>, %107, %cst_49 [1] : vector<16x32xf32> to vector<16xf32>
    %109 = vector.shape_cast %108 : vector<16xf32> to vector<16x1xf32>
    %cst_50 = arith.constant 3.200000e+01 : f32
    %110 = vector.broadcast %cst_50 : f32 to vector<16x1xf32>
    %111 = arith.divf %109, %110 : vector<16x1xf32>
    %cst_51 = arith.constant 9.99999974E-6 : f32
    %112 = vector.broadcast %cst_51 : f32 to vector<16x1xf32>
    %113 = arith.addf %111, %112 : vector<16x1xf32>
    %114 = math.rsqrt %113 : vector<16x1xf32>
    %115 = vector.broadcast %114 : vector<16x1xf32> to vector<16x32xf32>
    %116 = arith.mulf %106, %115 : vector<16x32xf32>
    %117 = vector.broadcast %5 : vector<1x32xf32> to vector<16x32xf32>
    %118 = arith.mulf %116, %117 : vector<16x32xf32>
    %119 = vector.broadcast %6 : vector<1x32xf32> to vector<16x32xf32>
    %120 = arith.addf %118, %119 : vector<16x32xf32>
    %c0_52 = arith.constant 0 : index
    %c0_53 = arith.constant 0 : index
    %121 = vector.load %arg7[%c0_52, %c0_53] : memref<32x64xf32, #tpu.memory_space<vmem>>, vector<32x64xf32>
    %cst_54 = arith.constant dense<0.000000e+00> : vector<16x64xf32>
    %122 = tpu.matmul %120, %121, %cst_54 {dimension_numbers = #tpu.dot_dimension_numbers<[1], [0], [0], [1], [0, 0, 1, 1], [], []>} : vector<16x32xf32>, vector<32x64xf32>, vector<16x64xf32> -> vector<16x64xf32>
    %c0_55 = arith.constant 0 : index
    %c0_56 = arith.constant 0 : index
    %123 = vector.load %arg8[%c0_55, %c0_56] : memref<1x64xf32, #tpu.memory_space<vmem>>, vector<1x64xf32>
    %124 = vector.broadcast %123 : vector<1x64xf32> to vector<16x64xf32>
    %125 = arith.addf %122, %124 : vector<16x64xf32>
    %cst_57 = arith.constant 5.000000e-01 : f32
    %126 = vector.broadcast %cst_57 : f32 to vector<16x64xf32>
    %127 = arith.mulf %126, %125 : vector<16x64xf32>
    %cst_58 = arith.constant 0.707106769 : f32
    %128 = vector.broadcast %cst_58 : f32 to vector<16x64xf32>
    %129 = arith.mulf %125, %128 : vector<16x64xf32>
    %130 = math.erf %129 : vector<16x64xf32>
    %cst_59 = arith.constant 1.000000e+00 : f32
    %131 = vector.broadcast %cst_59 : f32 to vector<16x64xf32>
    %132 = arith.addf %131, %130 : vector<16x64xf32>
    %133 = arith.mulf %127, %132 : vector<16x64xf32>
    %c0_60 = arith.constant 0 : index
    %c0_61 = arith.constant 0 : index
    %134 = vector.load %arg9[%c0_60, %c0_61] : memref<64x32xf32, #tpu.memory_space<vmem>>, vector<64x32xf32>
    %cst_62 = arith.constant dense<0.000000e+00> : vector<16x32xf32>
    %135 = tpu.matmul %133, %134, %cst_62 {dimension_numbers = #tpu.dot_dimension_numbers<[1], [0], [0], [1], [0, 0, 1, 1], [], []>} : vector<16x64xf32>, vector<64x32xf32>, vector<16x32xf32> -> vector<16x32xf32>
    %136 = vector.broadcast %7 : vector<1x32xf32> to vector<16x32xf32>
    %137 = arith.addf %135, %136 : vector<16x32xf32>
    %138 = arith.addf %120, %137 : vector<16x32xf32>
    %cst_63 = arith.constant dense<0.000000e+00> : vector<16xf32>
    %139 = vector.multi_reduction <add>, %138, %cst_63 [1] : vector<16x32xf32> to vector<16xf32>
    %140 = vector.shape_cast %139 : vector<16xf32> to vector<16x1xf32>
    %cst_64 = arith.constant 3.200000e+01 : f32
    %141 = vector.broadcast %cst_64 : f32 to vector<16x1xf32>
    %142 = arith.divf %140, %141 : vector<16x1xf32>
    %143 = vector.broadcast %142 : vector<16x1xf32> to vector<16x32xf32>
    %144 = arith.subf %138, %143 : vector<16x32xf32>
    %145 = arith.mulf %144, %144 : vector<16x32xf32>
    %cst_65 = arith.constant dense<0.000000e+00> : vector<16xf32>
    %146 = vector.multi_reduction <add>, %145, %cst_65 [1] : vector<16x32xf32> to vector<16xf32>
    %147 = vector.shape_cast %146 : vector<16xf32> to vector<16x1xf32>
    %cst_66 = arith.constant 3.200000e+01 : f32
    %148 = vector.broadcast %cst_66 : f32 to vector<16x1xf32>
    %149 = arith.divf %147, %148 : vector<16x1xf32>
    %cst_67 = arith.constant 9.99999974E-6 : f32
    %150 = vector.broadcast %cst_67 : f32 to vector<16x1xf32>
    %151 = arith.addf %149, %150 : vector<16x1xf32>
    %152 = math.rsqrt %151 : vector<16x1xf32>
    %153 = vector.broadcast %152 : vector<16x1xf32> to vector<16x32xf32>
    %154 = arith.mulf %144, %153 : vector<16x32xf32>
    %155 = vector.broadcast %8 : vector<1x32xf32> to vector<16x32xf32>
    %156 = arith.mulf %154, %155 : vector<16x32xf32>
    %157 = vector.broadcast %9 : vector<1x32xf32> to vector<16x32xf32>
    %158 = arith.addf %156, %157 : vector<16x32xf32>
    %c0_68 = arith.constant 0 : index
    %c0_69 = arith.constant 0 : index
    %c0_70 = arith.constant 0 : index
    %159 = vector.load %arg12[%c0_68, %c0_69, %c0_70] : memref<1x16x32xf32, #tpu.memory_space<vmem>>, vector<1x16x32xf32>
    %160 = vector.shape_cast %159 : vector<1x16x32xf32> to vector<16x32xf32>
    %161 = vector.shape_cast %158 : vector<16x32xf32> to vector<1x16x32xf32>
    tpu.vector_store %arg12[%c0_68, %c0_69, %c0_70], %161 {strides = array<i32>} : memref<1x16x32xf32, #tpu.memory_space<vmem>>, vector<1x16x32xf32>,
    return
  }
  func.func @transform_0(%arg0: i32) -> (i32, i32, i32) {
    %c0_i32 = arith.constant 0 : i32
    %c0_i32_0 = arith.constant 0 : i32
    %c0_i32_1 = arith.constant 0 : i32
    return %arg0, %c0_i32, %c0_i32_0 : i32, i32, i32
  }
  func.func @transform_1(%arg0: i32) -> (i32, i32) {
    %c0_i32 = arith.constant 0 : i32
    %c0_i32_0 = arith.constant 0 : i32
    %c0_i32_1 = arith.constant 0 : i32
    return %c0_i32, %c0_i32_0 : i32, i32
  }
  func.func @transform_2(%arg0: i32) -> (i32, i32) {
    %c0_i32 = arith.constant 0 : i32
    %c0_i32_0 = arith.constant 0 : i32
    %c0_i32_1 = arith.constant 0 : i32
    return %c0_i32, %c0_i32_0 : i32, i32
  }
  func.func @transform_3(%arg0: i32) -> (i32, i32) {
    %c0_i32 = arith.constant 0 : i32
    %c0_i32_0 = arith.constant 0 : i32
    %c0_i32_1 = arith.constant 0 : i32
    return %c0_i32, %c0_i32_0 : i32, i32
  }
  func.func @transform_4(%arg0: i32) -> (i32, i32) {
    %c0_i32 = arith.constant 0 : i32
    %c0_i32_0 = arith.constant 0 : i32
    %c0_i32_1 = arith.constant 0 : i32
    return %c0_i32, %c0_i32_0 : i32, i32
  }
  func.func @transform_5(%arg0: i32) -> (i32, i32) {
    %c0_i32 = arith.constant 0 : i32
    %c0_i32_0 = arith.constant 0 : i32
    %c0_i32_1 = arith.constant 0 : i32
    return %c0_i32, %c0_i32_0 : i32, i32
  }
  func.func @transform_6(%arg0: i32) -> (i32, i32) {
    %c0_i32 = arith.constant 0 : i32
    %c0_i32_0 = arith.constant 0 : i32
    %c0_i32_1 = arith.constant 0 : i32
    return %c0_i32, %c0_i32_0 : i32, i32
  }
  func.func @transform_7(%arg0: i32) -> (i32, i32) {
    %c0_i32 = arith.constant 0 : i32
    %c0_i32_0 = arith.constant 0 : i32
    %c0_i32_1 = arith.constant 0 : i32
    return %c0_i32, %c0_i32_0 : i32, i32
  }
  func.func @transform_8(%arg0: i32) -> (i32, i32) {
    %c0_i32 = arith.constant 0 : i32
    %c0_i32_0 = arith.constant 0 : i32
    %c0_i32_1 = arith.constant 0 : i32
    return %c0_i32, %c0_i32_0 : i32, i32
  }
  func.func @transform_9(%arg0: i32) -> (i32, i32) {
    %c0_i32 = arith.constant 0 : i32
    %c0_i32_0 = arith.constant 0 : i32
    %c0_i32_1 = arith.constant 0 : i32
    return %c0_i32, %c0_i32_0 : i32, i32
  }
  func.func @transform_10(%arg0: i32) -> (i32, i32) {
    %c0_i32 = arith.constant 0 : i32
    %c0_i32_0 = arith.constant 0 : i32
    %c0_i32_1 = arith.constant 0 : i32
    return %c0_i32, %c0_i32_0 : i32, i32
  }
  func.func @transform_11(%arg0: i32) -> (i32, i32, i32) {
    %c0_i32 = arith.constant 0 : i32
    %c0_i32_0 = arith.constant 0 : i32
    %c0_i32_1 = arith.constant 0 : i32
    return %arg0, %c0_i32, %c0_i32_0 : i32, i32, i32
  }
}

</mosaic_0001>

<llo_original>
// kernel: tpu_custom_call.1
$region0: #{tpu_custom_call.1}
  #allocation0 [shape = 'u32[]', space=smem, size = 0x4, offset = 0x4, fixed_abs, tag = 'smem constant byte address 0x4 - core index']
  #allocation1 [shape = 'u32[72,128]{1,0:T(1,128)}', space=vmem, size = 0x9000, scoped, tag = 'internal scratch']
  %s0 = inlined_call_operand.vmem [shape: f32[1,16,4], index: 0, kind: input, shape index: {}]
  %s1 = inlined_call_operand.hbm [shape: f32[4,32], index: 1, kind: input, shape index: {}]
  %s2 = inlined_call_operand.vmem [shape: f32[16,32], index: 2, kind: input, shape index: {}]
  %s3 = inlined_call_operand.vmem [shape: f32[32,96], index: 3, kind: input, shape index: {}]
  %s4 = inlined_call_operand.vmem [shape: f32[1,96], index: 4, kind: input, shape index: {}]
  %s5 = inlined_call_operand.vmem [shape: f32[32,32], index: 5, kind: input, shape index: {}]
  %s6 = inlined_call_operand.vmem [shape: f32[32,64], index: 6, kind: input, shape index: {}]
  %s7 = inlined_call_operand.hbm [shape: f32[1,64], index: 7, kind: input, shape index: {}]
  %s8 = inlined_call_operand.vmem [shape: f32[64,32], index: 8, kind: input, shape index: {}]
  %s9 = inlined_call_operand.vmem [shape: f32[8,32], index: 9, kind: input, shape index: {}]
  %s10 = inlined_call_operand.hbm [shape: f32[16,16], index: 10, kind: input, shape index: {}]
  %s11 = inlined_call_operand.hbm [shape: f32[1,16,32], index: 11, kind: output, shape index: {}]
  %s12 = sld [smem:[#allocation0]]
  $region66: #{tpu_custom_call.1} parent=0
    _
  %s14 = ssub.s32 1, %s12
  %s15 = scalar_select 0, %s14, %s12
  $region1: #{tpu_custom_call.1} parent=0
    #allocation2 [shape = 'u8[2048]{0}', space=vmem, size = 0x800, scoped, tag = 'input window, operand 1, single buffered']
    #allocation3 [shape = 's32[1]{0}', space=sflag, size = 0x4, scoped, tag = 'scoped memory for tpu_custom_call.1']
    #allocation4 [shape = 's32[1]{0}', space=sflag, size = 0x4, scoped, tag = 'scoped memory for tpu_custom_call.1']
    #allocation5 [shape = 'u8[512]{0}', space=vmem, size = 0x400, scoped, tag = 'input window, operand 7, single buffered']
    #allocation6 [shape = 's32[1]{0}', space=sflag, size = 0x4, scoped, tag = 'scoped memory for tpu_custom_call.1']
    #allocation7 [shape = 'u8[8192]{0}', space=vmem, size = 0x2000, scoped, tag = 'input window, operand 10, single buffered']
    #allocation8 [shape = 'u8[8192]{0}', space=vmem, size = 0x2000, scoped, tag = 'output window, operand 0, single buffered']
    %16 = vsyncpa [#allocation3], 0
    %17 = vsyncpa [#allocation6], 0
    %18 = vsyncpa [#allocation4], 0
    // Predicated region
    $region2: #{tpu_custom_call.1} parent=1 // pred_check
      _
    $region3: #{tpu_custom_call.1} parent=1 // pred_check_branch
      %20 = sbr.rel (0) target = $region5
    $region4: #{tpu_custom_call.1} parent=1 // pred_region
      _
    $region5: #{tpu_custom_call.1} parent=1 // pred_fallthru
      _
    // Predicated region
    $region6: #{tpu_custom_call.1} parent=1 // pred_check
      _
    $region7: #{tpu_custom_call.1} parent=1 // pred_check_branch
      %22 = sbr.rel (0) target = $region9
    $region8: #{tpu_custom_call.1} parent=1 // pred_region
      %24 = vsyncadd [#allocation3], 0
      %s26 = sshll.u32 %s1, 4
      %s27 = int_to_ptr.hbm [resolvable:$true] %s26
      %s28 = sshll.u32 [#allocation2], 4
      %s29 = int_to_ptr.vmem [resolvable:$true] %s28
      %31 = dma.hbm_to_vmem [thread:$0]  %s27, 64, %s29, [#allocation3]
    $region9: #{tpu_custom_call.1} parent=1 // pred_fallthru
      _
    // Predicated region
    $region10: #{tpu_custom_call.1} parent=1 // pred_check
      _
    $region11: #{tpu_custom_call.1} parent=1 // pred_check_branch
      %33 = sbr.rel (0) target = $region13
    $region12: #{tpu_custom_call.1} parent=1 // pred_region
      _
    $region13: #{tpu_custom_call.1} parent=1 // pred_fallthru
      _
    // Predicated region
    $region14: #{tpu_custom_call.1} parent=1 // pred_check
      _
    $region15: #{tpu_custom_call.1} parent=1 // pred_check_branch
      %35 = sbr.rel (0) target = $region17
    $region16: #{tpu_custom_call.1} parent=1 // pred_region
      _
    $region17: #{tpu_custom_call.1} parent=1 // pred_fallthru
      _
    // Predicated region
    $region18: #{tpu_custom_call.1} parent=1 // pred_check
      _
    $region19: #{tpu_custom_call.1} parent=1 // pred_check_branch
      %37 = sbr.rel (0) target = $region21
    $region20: #{tpu_custom_call.1} parent=1 // pred_region
      _
    $region21: #{tpu_custom_call.1} parent=1 // pred_fallthru
      _
    // Predicated region
    $region22: #{tpu_custom_call.1} parent=1 // pred_check
      _
    $region23: #{tpu_custom_call.1} parent=1 // pred_check_branch
      %39 = sbr.rel (0) target = $region25
    $region24: #{tpu_custom_call.1} parent=1 // pred_region
      _
    $region25: #{tpu_custom_call.1} parent=1 // pred_fallthru
      _
    // Predicated region
    $region26: #{tpu_custom_call.1} parent=1 // pred_check
      _
    $region27: #{tpu_custom_call.1} parent=1 // pred_check_branch
      %41 = sbr.rel (0) target = $region29
    $region28: #{tpu_custom_call.1} parent=1 // pred_region
      _
    $region29: #{tpu_custom_call.1} parent=1 // pred_fallthru
      _
    // Predicated region
    $region30: #{tpu_custom_call.1} parent=1 // pred_check
      _
    $region31: #{tpu_custom_call.1} parent=1 // pred_check_branch
      %43 = sbr.rel (0) target = $region33
    $region32: #{tpu_custom_call.1} parent=1 // pred_region
      %45 = vsyncadd [#allocation6], 0
      %s47 = sshll.u32 %s7, 4
      %s48 = int_to_ptr.hbm [resolvable:$true] %s47
      %s49 = sshll.u32 [#allocation5], 4
      %s50 = int_to_ptr.vmem [resolvable:$true] %s49
      %52 = dma.hbm_to_vmem [thread:$0]  %s48, 16, %s50, [#allocation6]
    $region33: #{tpu_custom_call.1} parent=1 // pred_fallthru
      _
    // Predicated region
    $region34: #{tpu_custom_call.1} parent=1 // pred_check
      _
    $region35: #{tpu_custom_call.1} parent=1 // pred_check_branch
      %54 = sbr.rel (0) target = $region37
    $region36: #{tpu_custom_call.1} parent=1 // pred_region
      _
    $region37: #{tpu_custom_call.1} parent=1 // pred_fallthru
      _
    // Predicated region
    $region38: #{tpu_custom_call.1} parent=1 // pred_check
      _
    $region39: #{tpu_custom_call.1} parent=1 // pred_check_branch
      %56 = sbr.rel (0) target = $region41
    $region40: #{tpu_custom_call.1} parent=1 // pred_region
      _
    $region41: #{tpu_custom_call.1} parent=1 // pred_fallthru
      _
    // Predicated region
    $region42: #{tpu_custom_call.1} parent=1 // pred_check
      _
    $region43: #{tpu_custom_call.1} parent=1 // pred_check_branch
      %58 = sbr.rel (0) target = $region45
    $region44: #{tpu_custom_call.1} parent=1 // pred_region
      %60 = vsyncadd [#allocation6], 0
      %s61 = sshll.u32 %s10, 4
      %s62 = int_to_ptr.hbm [resolvable:$true] %s61
      %s63 = sshll.u32 [#allocation7], 4
      %s64 = int_to_ptr.vmem [resolvable:$true] %s63
      %69 = dma.hbm_to_vmem [thread:$0]  %s62, 256, %s64, [#allocation6], 128, 128, 8
    $region45: #{tpu_custom_call.1} parent=1 // pred_fallthru
      _
    // Predicated region
    $region46: #{tpu_custom_call.1} parent=1 // pred_check
      _
    $region47: #{tpu_custom_call.1} parent=1 // pred_check_branch
      %71 = sbr.rel (0) target = $region49
    $region48: #{tpu_custom_call.1} parent=1 // pred_region
      %73 = dma.done [#allocation3], 64
    $region49: #{tpu_custom_call.1} parent=1 // pred_fallthru
      _
    // Predicated region
    $region50: #{tpu_custom_call.1} parent=1 // pred_check
      _
    $region51: #{tpu_custom_call.1} parent=1 // pred_check_branch
      %75 = sbr.rel (0) target = $region53
    $region52: #{tpu_custom_call.1} parent=1 // pred_region
      %77 = dma.done [#allocation6], 16
    $region53: #{tpu_custom_call.1} parent=1 // pred_fallthru
      _
    // Predicated region
    $region54: #{tpu_custom_call.1} parent=1 // pred_check
      _
    $region55: #{tpu_custom_call.1} parent=1 // pred_check_branch
      %79 = sbr.rel (0) target = $region57
    $region56: #{tpu_custom_call.1} parent=1 // pred_region
      %81 = dma.done [#allocation6], 256
    $region57: #{tpu_custom_call.1} parent=1 // pred_fallthru
      _
    %v82 = vld [vmem:[#allocation7] sm:$0xff]
    %v83 = vld [vmem:[#allocation7 + $0x8] sm:$0xff]
    %v84 = vld [vmem:[%s0] sm:$0xff]
    %v85 = vld [vmem:[%s0 + $0x8] sm:$0xff]
    %v86 = vld [vmem:[%s9] sm:$0x1]
    %v87 = vld [vmem:[%s9 + $0x1] sm:$0x1]
    %v88 = vld [vmem:[%s9 + $0x2] sm:$0x1]
    %v89 = vld [vmem:[%s9 + $0x3] sm:$0x1]
    %v90 = vld [vmem:[%s9 + $0x4] sm:$0x1]
    %v91 = vld [vmem:[%s9 + $0x5] sm:$0x1]
    %v92 = vld [vmem:[%s9 + $0x6] sm:$0x1]
    %v93 = vld [vmem:[#allocation2] sm:$0xf]
    %v94 = vperm.slane %v86, 0
    %vm95 = vcmask 31744
    %v97 = vsel %vm95, %v84, 0
    %v100 = vsel %vm95, %v85, 0
    %vm102 = vcmask 1043456
    %v104 = vsel %vm102, %v93, 0
    %106 = vmatpush.msra.mxu0 0.0
    %107 = vmatpush.msra.mxu0 0.0
    %108 = vmatpush.msra.mxu0 0.0
    %109 = vmatpush.msra.mxu0 0.0
    %110 = vmatpush.msra.mxu0 0.0
    %111 = vmatpush.msra.mxu0 0.0
    %112 = vmatpush.msra.mxu0 0.0
    %113 = vmatpush.msra.mxu0 0.0
    %114 = vmatpush.msra.mxu0 0.0
    %115 = vmatpush.msra.mxu0 0.0
    %116 = vmatpush.msra.mxu0 0.0
    %117 = vmatpush.msra.mxu0 0.0
    %118 = vmatpush.msra.mxu0 0.0
    %119 = vmatpush.msra.mxu0 0.0
    %120 = vmatpush.msra.mxu0 0.0
    %121 = vmatpush.msra.mxu0 %v104
    %122 = vmatmul.f32.gmra.mxu0 %v97
    %v123 = vpop.f32.mrf.mxu0
    %v124 = vadd.f32 %v94, %v123
    %125 = vmatmul.f32.gmra.mxu0 %v100
    %v126 = vpop.f32.mrf.mxu0
    %v127 = vadd.f32 %v94, %v126
    %128 = vdwg.mxu0
    %v129 = vld [vmem:[%s2] sm:$0xff]
    %v130 = vld [vmem:[%s2 + $0x8] sm:$0xff]
    %v131 = vadd.f32 %v124, %v129
    %v132 = vadd.f32 %v127, %v130
    %v133 = vld [vmem:[%s3] sm:$0xff]
    %v134 = vld [vmem:[%s3 + $0x8] sm:$0xff]
    %v135 = vld [vmem:[%s3 + $0x10] sm:$0xff]
    %v136 = vld [vmem:[%s3 + $0x18] sm:$0xff]
    %v137 = vld [vmem:[%s4] sm:$0x1]
    %v139 = vperm.slane %v137, 0
    %vm141 = vcmask 261120
    %v143 = vsel %vm141, %v131, 0
    %v146 = vsel %vm141, %v132, 0
    %148 = vmatpush.msra.mxu0 0.0
    %149 = vmatpush.msra.mxu0 0.0
    %150 = vmatpush.msra.mxu0 0.0
    %151 = vmatpush.msra.mxu0 0.0
    %152 = vmatpush.msra.mxu0 0.0
    %153 = vmatpush.msra.mxu0 0.0
    %154 = vmatpush.msra.mxu0 0.0
    %155 = vmatpush.msra.mxu0 0.0
    %156 = vmatpush.msra.mxu0 0.0
    %157 = vmatpush.msra.mxu0 0.0
    %158 = vmatpush.msra.mxu0 0.0
    %159 = vmatpush.msra.mxu0 0.0
    %160 = vmatpush.msra.mxu0 %v136
    %161 = vmatpush.msra.mxu0 %v135
    %162 = vmatpush.msra.mxu0 %v134
    %163 = vmatpush.msra.mxu0 %v133
    %164 = vmatmul.f32.gmra.mxu0 %v143
    %v165 = vpop.f32.mrf.mxu0
    %v166 = vadd.f32 %v139, %v165
    %167 = vmatmul.f32.gmra.mxu0 %v146
    %v168 = vpop.f32.mrf.mxu0
    %v169 = vadd.f32 %v139, %v168
    %170 = vdwg.mxu0
    %173 = vrot.lane.b32.xlu0 %v166, 96
    %v174 = vpop.permute.xlu0 %173
    %175 = vrot.lane.b32.xlu0 %v169, 96
    %v176 = vpop.permute.xlu0 %175
    %vm177 = vcmask 64512
    %v178 = vsel %vm177, %v166, 0
    %v180 = vsel %vm177, %v169, 0
    %v182 = vsel %vm177, %v174, 0
    %v184 = vsel %vm177, %v176, 0
    %186 = vmatpush.xpose.msra.mxu0 0.0
    %187 = vmatpush.xpose.msra.mxu0 0.0
    %188 = vmatpush.xpose.msra.mxu0 0.0
    %189 = vmatpush.xpose.msra.mxu0 0.0
    %190 = vmatpush.xpose.msra.mxu0 0.0
    %191 = vmatpush.xpose.msra.mxu0 0.0
    %192 = vmatpush.xpose.msra.mxu0 0.0
    %193 = vmatpush.xpose.msra.mxu0 0.0
    %194 = vmatpush.xpose.msra.mxu0 0.0
    %195 = vmatpush.xpose.msra.mxu0 0.0
    %196 = vmatpush.xpose.msra.mxu0 0.0
    %197 = vmatpush.xpose.msra.mxu0 0.0
    %198 = vmatpush.xpose.msra.mxu0 0.0
    %199 = vmatpush.xpose.msra.mxu0 0.0
    %200 = vmatpush.xpose.msra.mxu0 %v184
    %201 = vmatpush.xpose.msra.mxu0 %v182
    %202 = vmatmul.f32.gmra.mxu0 %v178
    %v203 = vpop.f32.mrf.mxu0
    %v204 = vadd.f32 %v82, %v203
    %205 = vmatmul.f32.gmra.mxu0 %v180
    %v206 = vpop.f32.mrf.mxu0
    %v207 = vadd.f32 %v83, %v206
    %208 = vdwg.mxu0
    %vm209 = vcmask 130048
    %v210 = vsel %vm209, %v204, -inf
    %211 = vmax.xlane.f32.xlu0 %v210
    %v212 = vpop.xlane.xlu0 %211
    %v213 = vsel %vm209, %v207, -inf
    %214 = vmax.xlane.f32.xlu0 %v213
    %v215 = vpop.xlane.xlu0 %214
    %v216 = vsub.f32 %v204, %v212
    %v217 = vsub.f32 %v207, %v215
    %v218 = vmul.f32 %v216, 1.442695
    %v219 = vpow.pop %v218
    %v220 = vmul.f32 %v217, 1.442695
    %v221 = vpow.pop %v220
    %v222 = vsel %vm209, %v219, 0.0
    %223 = vadd.xlane.f32.xlu0 %v222
    %v224 = vpop.xlane.xlu0 %223
    %v225 = vsel %vm209, %v221, 0.0
    %226 = vadd.xlane.f32.xlu0 %v225
    %v227 = vpop.xlane.xlu0 %226
    %v228 = vrcp.pop %v224
    %v229 = vrcp.pop %v227
    %v230 = vmul.f32 %v219, %v228
    %v231 = vmul.f32 %v221, %v229
    %232 = vrot.lane.b32.xlu0 %v166, 64
    %v233 = vpop.permute.xlu0 %232
    %234 = vrot.lane.b32.xlu0 %v169, 64
    %v235 = vpop.permute.xlu0 %234
    %v239 = vsel %vm209, %v230, 0
    %v242 = vsel %vm209, %v231, 0
    %244 = vmatpush.msra.mxu0 0.0
    %245 = vmatpush.msra.mxu0 0.0
    %246 = vmatpush.msra.mxu0 0.0
    %247 = vmatpush.msra.mxu0 0.0
    %248 = vmatpush.msra.mxu0 0.0
    %249 = vmatpush.msra.mxu0 0.0
    %250 = vmatpush.msra.mxu0 0.0
    %251 = vmatpush.msra.mxu0 0.0
    %252 = vmatpush.msra.mxu0 0.0
    %253 = vmatpush.msra.mxu0 0.0
    %254 = vmatpush.msra.mxu0 0.0
    %255 = vmatpush.msra.mxu0 0.0
    %256 = vmatpush.msra.mxu0 0.0
    %257 = vmatpush.msra.mxu0 0.0
    %258 = vmatpush.msra.mxu0 %v235
    %259 = vmatpush.msra.mxu0 %v233
    %260 = vmatmul.f32.gmra.mxu0 %v239
    %v261 = vpop.f32.mrf.mxu0
    %v262 = vadd.f32 0.0, %v261
    %263 = vmatmul.f32.gmra.mxu0 %v242
    %v264 = vpop.f32.mrf.mxu0
    %v265 = vadd.f32 0.0, %v264
    %266 = vdwg.mxu0
    %v267 = vld [vmem:[%s5] sm:$0xff]
    %268 = vrot.lane.b32.xlu0 %v166, 120
    %v269 = vpop.permute.xlu0 %268
    %270 = vrot.lane.b32.xlu0 %v169, 120
    %v271 = vpop.permute.xlu0 %270
    %272 = vrot.lane.b32.xlu0 %v166, 88
    %v273 = vpop.permute.xlu0 %272
    %274 = vrot.lane.b32.xlu0 %v169, 88
    %v275 = vpop.permute.xlu0 %274
    %v276 = vsel %vm177, %v269, 0
    %v278 = vsel %vm177, %v271, 0
    %v280 = vsel %vm177, %v273, 0
    %v282 = vsel %vm177, %v275, 0
    %284 = vmatpush.xpose.msra.mxu0 0.0
    %285 = vmatpush.xpose.msra.mxu0 0.0
    %286 = vmatpush.xpose.msra.mxu0 0.0
    %287 = vmatpush.xpose.msra.mxu0 0.0
    %288 = vmatpush.xpose.msra.mxu0 0.0
    %289 = vmatpush.xpose.msra.mxu0 0.0
    %290 = vmatpush.xpose.msra.mxu0 0.0
    %291 = vmatpush.xpose.msra.mxu0 0.0
    %292 = vmatpush.xpose.msra.mxu0 0.0
    %293 = vmatpush.xpose.msra.mxu0 0.0
    %294 = vmatpush.xpose.msra.mxu0 0.0
    %295 = vmatpush.xpose.msra.mxu0 0.0
    %296 = vmatpush.xpose.msra.mxu0 0.0
    %297 = vmatpush.xpose.msra.mxu0 0.0
    %298 = vmatpush.xpose.msra.mxu0 %v282
    %299 = vmatpush.xpose.msra.mxu0 %v280
    %300 = vmatmul.f32.gmra.mxu0 %v276
    %v301 = vpop.f32.mrf.mxu0
    %v302 = vadd.f32 %v82, %v301
    %303 = vmatmul.f32.gmra.mxu0 %v278
    %v304 = vpop.f32.mrf.mxu0
    %v305 = vadd.f32 %v83, %v304
    %306 = vdwg.mxu0
    %v307 = vsel %vm209, %v302, -inf
    %308 = vmax.xlane.f32.xlu0 %v307
    %v309 = vpop.xlane.xlu0 %308
    %v310 = vsel %vm209, %v305, -inf
    %311 = vmax.xlane.f32.xlu0 %v310
    %v312 = vpop.xlane.xlu0 %311
    %v313 = vsub.f32 %v302, %v309
    %v314 = vsub.f32 %v305, %v312
    %v315 = vmul.f32 %v313, 1.442695
    %v316 = vpow.pop %v315
    %v317 = vmul.f32 %v314, 1.442695
    %v318 = vpow.pop %v317
    %v319 = vsel %vm209, %v316, 0.0
    %320 = vadd.xlane.f32.xlu0 %v319
    %v321 = vpop.xlane.xlu0 %320
    %v322 = vsel %vm209, %v318, 0.0
    %323 = vadd.xlane.f32.xlu0 %v322
    %v324 = vpop.xlane.xlu0 %323
    %v325 = vrcp.pop %v321
    %v326 = vrcp.pop %v324
    %v327 = vmul.f32 %v316, %v325
    %v328 = vmul.f32 %v318, %v326
    %329 = vrot.lane.b32.xlu0 %v166, 56
    %v330 = vpop.permute.xlu0 %329
    %331 = vrot.lane.b32.xlu0 %v169, 56
    %v332 = vpop.permute.xlu0 %331
    %v336 = vsel %vm209, %v327, 0
    %v339 = vsel %vm209, %v328, 0
    %341 = vmatpush.msra.mxu0 0.0
    %342 = vmatpush.msra.mxu0 0.0
    %343 = vmatpush.msra.mxu0 0.0
    %344 = vmatpush.msra.mxu0 0.0
    %345 = vmatpush.msra.mxu0 0.0
    %346 = vmatpush.msra.mxu0 0.0
    %347 = vmatpush.msra.mxu0 0.0
    %348 = vmatpush.msra.mxu0 0.0
    %349 = vmatpush.msra.mxu0 0.0
    %350 = vmatpush.msra.mxu0 0.0
    %351 = vmatpush.msra.mxu0 0.0
    %352 = vmatpush.msra.mxu0 0.0
    %353 = vmatpush.msra.mxu0 0.0
    %354 = vmatpush.msra.mxu0 0.0
    %355 = vmatpush.msra.mxu0 %v332
    %356 = vmatpush.msra.mxu0 %v330
    %357 = vmatmul.f32.gmra.mxu0 %v336
    %v358 = vpop.f32.mrf.mxu0
    %v359 = vadd.f32 0.0, %v358
    %360 = vmatmul.f32.gmra.mxu0 %v339
    %v361 = vpop.f32.mrf.mxu0
    %v362 = vadd.f32 0.0, %v361
    %363 = vdwg.mxu0
    %v364 = vld [vmem:[%s5 + $0x8] sm:$0xff]
    %v366 = vsel %vm177, %v359, 0
    %v369 = vsel %vm177, %v362, 0
    %371 = vmatpush.msra.mxu0 0.0
    %372 = vmatpush.msra.mxu0 0.0
    %373 = vmatpush.msra.mxu0 0.0
    %374 = vmatpush.msra.mxu0 0.0
    %375 = vmatpush.msra.mxu0 0.0
    %376 = vmatpush.msra.mxu0 0.0
    %377 = vmatpush.msra.mxu0 0.0
    %378 = vmatpush.msra.mxu0 0.0
    %379 = vmatpush.msra.mxu0 0.0
    %380 = vmatpush.msra.mxu0 0.0
    %381 = vmatpush.msra.mxu0 0.0
    %382 = vmatpush.msra.mxu0 0.0
    %383 = vmatpush.msra.mxu0 0.0
    %384 = vmatpush.msra.mxu0 0.0
    %385 = vmatpush.msra.mxu0 0.0
    %386 = vmatpush.msra.mxu0 %v364
    %387 = vmatmul.f32.gmra.mxu0 %v366
    %v388 = vpop.f32.mrf.mxu0
    %v389 = vadd.f32 0.0, %v388
    %390 = vmatmul.f32.gmra.mxu0 %v369
    %v391 = vpop.f32.mrf.mxu0
    %v392 = vadd.f32 0.0, %v391
    %393 = vdwg.mxu0
    %v395 = vsel %vm177, %v262, 0
    %v398 = vsel %vm177, %v265, 0
    %400 = vmatpush.msra.mxu0 0.0
    %401 = vmatpush.msra.mxu0 0.0
    %402 = vmatpush.msra.mxu0 0.0
    %403 = vmatpush.msra.mxu0 0.0
    %404 = vmatpush.msra.mxu0 0.0
    %405 = vmatpush.msra.mxu0 0.0
    %406 = vmatpush.msra.mxu0 0.0
    %407 = vmatpush.msra.mxu0 0.0
    %408 = vmatpush.msra.mxu0 0.0
    %409 = vmatpush.msra.mxu0 0.0
    %410 = vmatpush.msra.mxu0 0.0
    %411 = vmatpush.msra.mxu0 0.0
    %412 = vmatpush.msra.mxu0 0.0
    %413 = vmatpush.msra.mxu0 0.0
    %414 = vmatpush.msra.mxu0 0.0
    %415 = vmatpush.msra.mxu0 %v267
    %416 = vmatmul.f32.gmra.mxu0 %v395
    %v417 = vpop.f32.mrf.mxu0
    %v418 = vadd.f32 %v389, %v417
    %419 = vmatmul.f32.gmra.mxu0 %v398
    %v420 = vpop.f32.mrf.mxu0
    %v421 = vadd.f32 %v392, %v420
    %422 = vdwg.mxu0
    %423 = vrot.lane.b32.xlu0 %v166, 112
    %v424 = vpop.permute.xlu0 %423
    %425 = vrot.lane.b32.xlu0 %v169, 112
    %v426 = vpop.permute.xlu0 %425
    %427 = vrot.lane.b32.xlu0 %v166, 80
    %v428 = vpop.permute.xlu0 %427
    %429 = vrot.lane.b32.xlu0 %v169, 80
    %v430 = vpop.permute.xlu0 %429
    %v431 = vsel %vm177, %v424, 0
    %v433 = vsel %vm177, %v426, 0
    %v435 = vsel %vm177, %v428, 0
    %v437 = vsel %vm177, %v430, 0
    %439 = vmatpush.xpose.msra.mxu0 0.0
    %440 = vmatpush.xpose.msra.mxu0 0.0
    %441 = vmatpush.xpose.msra.mxu0 0.0
    %442 = vmatpush.xpose.msra.mxu0 0.0
    %443 = vmatpush.xpose.msra.mxu0 0.0
    %444 = vmatpush.xpose.msra.mxu0 0.0
    %445 = vmatpush.xpose.msra.mxu0 0.0
    %446 = vmatpush.xpose.msra.mxu0 0.0
    %447 = vmatpush.xpose.msra.mxu0 0.0
    %448 = vmatpush.xpose.msra.mxu0 0.0
    %449 = vmatpush.xpose.msra.mxu0 0.0
    %450 = vmatpush.xpose.msra.mxu0 0.0
    %451 = vmatpush.xpose.msra.mxu0 0.0
    %452 = vmatpush.xpose.msra.mxu0 0.0
    %453 = vmatpush.xpose.msra.mxu0 %v437
    %454 = vmatpush.xpose.msra.mxu0 %v435
    %455 = vmatmul.f32.gmra.mxu0 %v431
    %v456 = vpop.f32.mrf.mxu0
    %v457 = vadd.f32 %v82, %v456
    %458 = vmatmul.f32.gmra.mxu0 %v433
    %v459 = vpop.f32.mrf.mxu0
    %v460 = vadd.f32 %v83, %v459
    %461 = vdwg.mxu0
    %v462 = vsel %vm209, %v457, -inf
    %463 = vmax.xlane.f32.xlu0 %v462
    %v464 = vpop.xlane.xlu0 %463
    %v465 = vsel %vm209, %v460, -inf
    %466 = vmax.xlane.f32.xlu0 %v465
    %v467 = vpop.xlane.xlu0 %466
    %v468 = vsub.f32 %v457, %v464
    %v469 = vsub.f32 %v460, %v467
    %v470 = vmul.f32 %v468, 1.442695
    %v471 = vpow.pop %v470
    %v472 = vmul.f32 %v469, 1.442695
    %v473 = vpow.pop %v472
    %v474 = vsel %vm209, %v471, 0.0
    %475 = vadd.xlane.f32.xlu0 %v474
    %v476 = vpop.xlane.xlu0 %475
    %v477 = vsel %vm209, %v473, 0.0
    %478 = vadd.xlane.f32.xlu0 %v477
    %v479 = vpop.xlane.xlu0 %478
    %v480 = vrcp.pop %v476
    %v481 = vrcp.pop %v479
    %v482 = vmul.f32 %v471, %v480
    %v483 = vmul.f32 %v473, %v481
    %484 = vrot.lane.b32.xlu0 %v166, 48
    %v485 = vpop.permute.xlu0 %484
    %486 = vrot.lane.b32.xlu0 %v169, 48
    %v487 = vpop.permute.xlu0 %486
    %v491 = vsel %vm209, %v482, 0
    %v494 = vsel %vm209, %v483, 0
    %496 = vmatpush.msra.mxu0 0.0
    %497 = vmatpush.msra.mxu0 0.0
    %498 = vmatpush.msra.mxu0 0.0
    %499 = vmatpush.msra.mxu0 0.0
    %500 = vmatpush.msra.mxu0 0.0
    %501 = vmatpush.msra.mxu0 0.0
    %502 = vmatpush.msra.mxu0 0.0
    %503 = vmatpush.msra.mxu0 0.0
    %504 = vmatpush.msra.mxu0 0.0
    %505 = vmatpush.msra.mxu0 0.0
    %506 = vmatpush.msra.mxu0 0.0
    %507 = vmatpush.msra.mxu0 0.0
    %508 = vmatpush.msra.mxu0 0.0
    %509 = vmatpush.msra.mxu0 0.0
    %510 = vmatpush.msra.mxu0 %v487
    %511 = vmatpush.msra.mxu0 %v485
    %512 = vmatmul.f32.gmra.mxu0 %v491
    %v513 = vpop.f32.mrf.mxu0
    %v514 = vadd.f32 0.0, %v513
    %515 = vmatmul.f32.gmra.mxu0 %v494
    %v516 = vpop.f32.mrf.mxu0
    %v517 = vadd.f32 0.0, %v516
    %518 = vdwg.mxu0
    %v519 = vld [vmem:[%s5 + $0x10] sm:$0xff]
    %v521 = vsel %vm177, %v514, 0
    %v524 = vsel %vm177, %v517, 0
    %526 = vmatpush.msra.mxu0 0.0
    %527 = vmatpush.msra.mxu0 0.0
    %528 = vmatpush.msra.mxu0 0.0
    %529 = vmatpush.msra.mxu0 0.0
    %530 = vmatpush.msra.mxu0 0.0
    %531 = vmatpush.msra.mxu0 0.0
    %532 = vmatpush.msra.mxu0 0.0
    %533 = vmatpush.msra.mxu0 0.0
    %534 = vmatpush.msra.mxu0 0.0
    %535 = vmatpush.msra.mxu0 0.0
    %536 = vmatpush.msra.mxu0 0.0
    %537 = vmatpush.msra.mxu0 0.0
    %538 = vmatpush.msra.mxu0 0.0
    %539 = vmatpush.msra.mxu0 0.0
    %540 = vmatpush.msra.mxu0 0.0
    %541 = vmatpush.msra.mxu0 %v519
    %542 = vmatmul.f32.gmra.mxu0 %v521
    %v543 = vpop.f32.mrf.mxu0
    %v544 = vadd.f32 0.0, %v543
    %545 = vmatmul.f32.gmra.mxu0 %v524
    %v546 = vpop.f32.mrf.mxu0
    %v547 = vadd.f32 0.0, %v546
    %548 = vdwg.mxu0
    %v549 = vadd.f32 %v418, %v544
    %v550 = vadd.f32 %v421, %v547
    %551 = vrot.lane.b32.xlu0 %v166, 104
    %v552 = vpop.permute.xlu0 %551
    %553 = vrot.lane.b32.xlu0 %v169, 104
    %v554 = vpop.permute.xlu0 %553
    %555 = vrot.lane.b32.xlu0 %v166, 72
    %v556 = vpop.permute.xlu0 %555
    %557 = vrot.lane.b32.xlu0 %v169, 72
    %v558 = vpop.permute.xlu0 %557
    %v559 = vsel %vm177, %v552, 0
    %v561 = vsel %vm177, %v554, 0
    %v563 = vsel %vm177, %v556, 0
    %v565 = vsel %vm177, %v558, 0
    %567 = vmatpush.xpose.msra.mxu0 0.0
    %568 = vmatpush.xpose.msra.mxu0 0.0
    %569 = vmatpush.xpose.msra.mxu0 0.0
    %570 = vmatpush.xpose.msra.mxu0 0.0
    %571 = vmatpush.xpose.msra.mxu0 0.0
    %572 = vmatpush.xpose.msra.mxu0 0.0
    %573 = vmatpush.xpose.msra.mxu0 0.0
    %574 = vmatpush.xpose.msra.mxu0 0.0
    %575 = vmatpush.xpose.msra.mxu0 0.0
    %576 = vmatpush.xpose.msra.mxu0 0.0
    %577 = vmatpush.xpose.msra.mxu0 0.0
    %578 = vmatpush.xpose.msra.mxu0 0.0
    %579 = vmatpush.xpose.msra.mxu0 0.0
    %580 = vmatpush.xpose.msra.mxu0 0.0
    %581 = vmatpush.xpose.msra.mxu0 %v565
    %582 = vmatpush.xpose.msra.mxu0 %v563
    %583 = vmatmul.f32.gmra.mxu0 %v559
    %v584 = vpop.f32.mrf.mxu0
    %v585 = vadd.f32 %v82, %v584
    %586 = vmatmul.f32.gmra.mxu0 %v561
    %v587 = vpop.f32.mrf.mxu0
    %v588 = vadd.f32 %v83, %v587
    %589 = vdwg.mxu0
    %v590 = vsel %vm209, %v585, -inf
    %591 = vmax.xlane.f32.xlu0 %v590
    %v592 = vpop.xlane.xlu0 %591
    %v593 = vsel %vm209, %v588, -inf
    %594 = vmax.xlane.f32.xlu0 %v593
    %v595 = vpop.xlane.xlu0 %594
    %v596 = vsub.f32 %v585, %v592
    %v597 = vsub.f32 %v588, %v595
    %v598 = vmul.f32 %v596, 1.442695
    %v599 = vpow.pop %v598
    %v600 = vmul.f32 %v597, 1.442695
    %v601 = vpow.pop %v600
    %v602 = vsel %vm209, %v599, 0.0
    %603 = vadd.xlane.f32.xlu0 %v602
    %v604 = vpop.xlane.xlu0 %603
    %v605 = vsel %vm209, %v601, 0.0
    %606 = vadd.xlane.f32.xlu0 %v605
    %v607 = vpop.xlane.xlu0 %606
    %v608 = vrcp.pop %v604
    %v609 = vrcp.pop %v607
    %v610 = vmul.f32 %v599, %v608
    %v611 = vmul.f32 %v601, %v609
    %612 = vrot.lane.b32.xlu0 %v166, 40
    %v613 = vpop.permute.xlu0 %612
    %614 = vrot.lane.b32.xlu0 %v169, 40
    %v615 = vpop.permute.xlu0 %614
    %v619 = vsel %vm209, %v610, 0
    %v622 = vsel %vm209, %v611, 0
    %624 = vmatpush.msra.mxu0 0.0
    %625 = vmatpush.msra.mxu0 0.0
    %626 = vmatpush.msra.mxu0 0.0
    %627 = vmatpush.msra.mxu0 0.0
    %628 = vmatpush.msra.mxu0 0.0
    %629 = vmatpush.msra.mxu0 0.0
    %630 = vmatpush.msra.mxu0 0.0
    %631 = vmatpush.msra.mxu0 0.0
    %632 = vmatpush.msra.mxu0 0.0
    %633 = vmatpush.msra.mxu0 0.0
    %634 = vmatpush.msra.mxu0 0.0
    %635 = vmatpush.msra.mxu0 0.0
    %636 = vmatpush.msra.mxu0 0.0
    %637 = vmatpush.msra.mxu0 0.0
    %638 = vmatpush.msra.mxu0 %v615
    %639 = vmatpush.msra.mxu0 %v613
    %640 = vmatmul.f32.gmra.mxu0 %v619
    %v641 = vpop.f32.mrf.mxu0
    %v642 = vadd.f32 0.0, %v641
    %643 = vmatmul.f32.gmra.mxu0 %v622
    %v644 = vpop.f32.mrf.mxu0
    %v645 = vadd.f32 0.0, %v644
    %646 = vdwg.mxu0
    %v647 = vld [vmem:[%s5 + $0x18] sm:$0xff]
    %v649 = vsel %vm177, %v642, 0
    %v652 = vsel %vm177, %v645, 0
    %654 = vmatpush.msra.mxu0 0.0
    %655 = vmatpush.msra.mxu0 0.0
    %656 = vmatpush.msra.mxu0 0.0
    %657 = vmatpush.msra.mxu0 0.0
    %658 = vmatpush.msra.mxu0 0.0
    %659 = vmatpush.msra.mxu0 0.0
    %660 = vmatpush.msra.mxu0 0.0
    %661 = vmatpush.msra.mxu0 0.0
    %662 = vmatpush.msra.mxu0 0.0
    %663 = vmatpush.msra.mxu0 0.0
    %664 = vmatpush.msra.mxu0 0.0
    %665 = vmatpush.msra.mxu0 0.0
    %666 = vmatpush.msra.mxu0 0.0
    %667 = vmatpush.msra.mxu0 0.0
    %668 = vmatpush.msra.mxu0 0.0
    %669 = vmatpush.msra.mxu0 %v647
    %670 = vmatmul.f32.gmra.mxu0 %v649
    %v671 = vpop.f32.mrf.mxu0
    %v672 = vadd.f32 0.0, %v671
    %673 = vmatmul.f32.gmra.mxu0 %v652
    %v674 = vpop.f32.mrf.mxu0
    %v675 = vadd.f32 0.0, %v674
    %676 = vdwg.mxu0
    %v677 = vadd.f32 %v549, %v672
    %v678 = vadd.f32 %v550, %v675
    %v679 = vperm.slane %v87, 0
    %v680 = vadd.f32 %v677, %v679
    %v681 = vadd.f32 %v678, %v679
    %v682 = vadd.f32 %v131, %v680
    %v683 = vadd.f32 %v132, %v681
    %v684 = vsel %vm141, %v682, 0.0
    %685 = vadd.xlane.f32.xlu0 %v684
    %v686 = vpop.xlane.xlu0 %685
    %v687 = vsel %vm141, %v683, 0.0
    %688 = vadd.xlane.f32.xlu0 %v687
    %v689 = vpop.xlane.xlu0 %688
    %v690 = vrcp.pop 32.0
    %v691 = vmul.f32 32.0, %v690
    %v692 = vsub.f32 1.0, %v691
    %v693 = vmul.f32 %v690, %v692
    %v694 = vadd.f32 %v690, %v693
    %vm695 = vweird.f32 %v690
    %v696 = vsel %vm695, %v690, %v694
    %v697 = vmul.f32 %v686, %v696
    %v698 = vmul.f32 %v689, %v696
    %v699 = vsub.f32 %v682, %v697
    %v700 = vsub.f32 %v683, %v698
    %v701 = vmul.f32 %v699, %v699
    %v702 = vmul.f32 %v700, %v700
    %v703 = vsel %vm141, %v701, 0.0
    %704 = vadd.xlane.f32.xlu0 %v703
    %v705 = vpop.xlane.xlu0 %704
    %v706 = vsel %vm141, %v702, 0.0
    %707 = vadd.xlane.f32.xlu0 %v706
    %v708 = vpop.xlane.xlu0 %707
    %v709 = vmul.f32 %v705, %v696
    %v710 = vmul.f32 %v708, %v696
    %v711 = vadd.f32 %v709, 1e-05
    %v712 = vadd.f32 %v710, 1e-05
    %v713 = vrsqrt.pop %v711
    %v714 = vmul.f32 %v713, %v711
    %v715 = vmul.f32 %v714, %v713
    %v716 = vmul.f32 0.5, %v715
    %v717 = vsub.f32 1.5, %v716
    %v718 = vmul.f32 %v713, %v717
    %vm719 = vweird.f32 %v711
    %vm720 = vweird.f32 %v713
    %vm721 = vmor %vm719, %vm720
    %v722 = vsel %vm721, %v713, %v718
    %v723 = vrsqrt.pop %v712
    %v724 = vmul.f32 %v723, %v712
    %v725 = vmul.f32 %v724, %v723
    %v726 = vmul.f32 0.5, %v725
    %v727 = vsub.f32 1.5, %v726
    %v728 = vmul.f32 %v723, %v727
    %vm729 = vweird.f32 %v712
    %vm730 = vweird.f32 %v723
    %vm731 = vmor %vm729, %vm730
    %v732 = vsel %vm731, %v723, %v728
    %v733 = vmul.f32 %v699, %v722
    %v734 = vmul.f32 %v700, %v732
    %v735 = vperm.slane %v88, 0
    %v736 = vmul.f32 %v733, %v735
    %v737 = vmul.f32 %v734, %v735
    %v738 = vperm.slane %v89, 0
    %v739 = vadd.f32 %v736, %v738
    %v740 = vadd.f32 %v737, %v738
    %v741 = vld [vmem:[%s6] sm:$0xff]
    %v742 = vld [vmem:[%s6 + $0x8] sm:$0xff]
    %v743 = vld [vmem:[%s6 + $0x10] sm:$0xff]
    %v744 = vld [vmem:[%s6 + $0x18] sm:$0xff]
    %v745 = vld [vmem:[#allocation5] sm:$0x1]
    %v747 = vperm.slane %v745, 0
    %v750 = vsel %vm141, %v739, 0
    %v753 = vsel %vm141, %v740, 0
    %755 = vmatpush.msra.mxu0 0.0
    %756 = vmatpush.msra.mxu0 0.0
    %757 = vmatpush.msra.mxu0 0.0
    %758 = vmatpush.msra.mxu0 0.0
    %759 = vmatpush.msra.mxu0 0.0
    %760 = vmatpush.msra.mxu0 0.0
    %761 = vmatpush.msra.mxu0 0.0
    %762 = vmatpush.msra.mxu0 0.0
    %763 = vmatpush.msra.mxu0 0.0
    %764 = vmatpush.msra.mxu0 0.0
    %765 = vmatpush.msra.mxu0 0.0
    %766 = vmatpush.msra.mxu0 0.0
    %767 = vmatpush.msra.mxu0 %v744
    %768 = vmatpush.msra.mxu0 %v743
    %769 = vmatpush.msra.mxu0 %v742
    %770 = vmatpush.msra.mxu0 %v741
    %771 = vmatmul.f32.gmra.mxu0 %v750
    %v772 = vpop.f32.mrf.mxu0
    %v773 = vadd.f32 %v747, %v772
    %774 = vmatmul.f32.gmra.mxu0 %v753
    %v775 = vpop.f32.mrf.mxu0
    %v776 = vadd.f32 %v747, %v775
    %777 = vdwg.mxu0
    %v778 = vmul.f32 %v773, 0.5
    %v779 = vmul.f32 %v776, 0.5
    %v780 = vmul.f32 %v773, 0.70710677
    %v781 = vmul.f32 %v776, 0.70710677
    %v782 = vmul.f32 %v780, %v780
    %v783 = vmin.f32 16.0, %v782
    %v784 = vmul.f32 %v783, 2.1237322e-06
    %v785 = vadd.f32 %v784, 0.00028619796
    %v786 = vmul.f32 %v783, %v785
    %v787 = vadd.f32 %v786, 0.0036580483
    %v788 = vmul.f32 %v783, %v787
    %v789 = vadd.f32 %v788, 0.05243302
    %v790 = vmul.f32 %v783, %v789
    %v791 = vadd.f32 %v790, 0.18741608
    %v792 = vmul.f32 %v783, %v791
    %v793 = vadd.f32 %v792, 1.1283791
    %v794 = vmul.f32 %v780, %v793
    %v795 = vmul.f32 %v783, 3.8918573e-05
    %v796 = vadd.f32 %v795, 0.001143296
    %v797 = vmul.f32 %v783, %v796
    %v798 = vadd.f32 %v797, 0.014752088
    %v799 = vmul.f32 %v783, %v798
    %v800 = vadd.f32 %v799, 0.112945676
    %v801 = vmul.f32 %v783, %v800
    %v802 = vadd.f32 %v801, 0.4994258
    %v803 = vmul.f32 %v783, %v802
    %v804 = vadd.f32 %v803, 1.0
    %v805 = vrcp.pop %v804
    %v806 = vmul.f32 %v804, %v805
    %v807 = vsub.f32 1.0, %v806
    %v808 = vmul.f32 %v805, %v807
    %v809 = vadd.f32 %v805, %v808
    %vm810 = vweird.f32 %v804
    %vm811 = vweird.f32 %v805
    %vm812 = vmor %vm810, %vm811
    %v813 = vsel %vm812, %v805, %v809
    %v814 = vand.u32 2147483647, %v804
    %vm815 = vcmp.eq.f32.partialorder %v814, 8.507059e+37
    %v816 = vand.u32 %v804, 2147483648
    %v817 = vor.u32 1.1754944e-38, %v816
    %v818 = vsel %vm815, %v817, %v813
    %v819 = vmul.f32 %v794, %v818
    %v820 = vmin.f32 %v819, 1.0
    %v821 = vmax.f32 %v820, -1.0
    %v822 = vmul.f32 %v781, %v781
    %v823 = vmin.f32 16.0, %v822
    %v824 = vmul.f32 %v823, 2.1237322e-06
    %v825 = vadd.f32 %v824, 0.00028619796
    %v826 = vmul.f32 %v823, %v825
    %v827 = vadd.f32 %v826, 0.0036580483
    %v828 = vmul.f32 %v823, %v827
    %v829 = vadd.f32 %v828, 0.05243302
    %v830 = vmul.f32 %v823, %v829
    %v831 = vadd.f32 %v830, 0.18741608
    %v832 = vmul.f32 %v823, %v831
    %v833 = vadd.f32 %v832, 1.1283791
    %v834 = vmul.f32 %v781, %v833
    %v835 = vmul.f32 %v823, 3.8918573e-05
    %v836 = vadd.f32 %v835, 0.001143296
    %v837 = vmul.f32 %v823, %v836
    %v838 = vadd.f32 %v837, 0.014752088
    %v839 = vmul.f32 %v823, %v838
    %v840 = vadd.f32 %v839, 0.112945676
    %v841 = vmul.f32 %v823, %v840
    %v842 = vadd.f32 %v841, 0.4994258
    %v843 = vmul.f32 %v823, %v842
    %v844 = vadd.f32 %v843, 1.0
    %v845 = vrcp.pop %v844
    %v846 = vmul.f32 %v844, %v845
    %v847 = vsub.f32 1.0, %v846
    %v848 = vmul.f32 %v845, %v847
    %v849 = vadd.f32 %v845, %v848
    %vm850 = vweird.f32 %v844
    %vm851 = vweird.f32 %v845
    %vm852 = vmor %vm850, %vm851
    %v853 = vsel %vm852, %v845, %v849
    %v854 = vand.u32 2147483647, %v844
    %vm855 = vcmp.eq.f32.partialorder %v854, 8.507059e+37
    %v856 = vand.u32 %v844, 2147483648
    %v857 = vor.u32 1.1754944e-38, %v856
    %v858 = vsel %vm855, %v857, %v853
    %v859 = vmul.f32 %v834, %v858
    %v860 = vmin.f32 %v859, 1.0
    %v861 = vmax.f32 %v860, -1.0
    %v862 = vadd.f32 %v821, 1.0
    %v863 = vadd.f32 %v861, 1.0
    %v864 = vmul.f32 %v778, %v862
    %v865 = vmul.f32 %v779, %v863
    %v866 = vld [vmem:[%s8] sm:$0xff]
    %v867 = vld [vmem:[%s8 + $0x8] sm:$0xff]
    %v868 = vld [vmem:[%s8 + $0x10] sm:$0xff]
    %v869 = vld [vmem:[%s8 + $0x18] sm:$0xff]
    %v870 = vld [vmem:[%s8 + $0x20] sm:$0xff]
    %v871 = vld [vmem:[%s8 + $0x28] sm:$0xff]
    %v872 = vld [vmem:[%s8 + $0x30] sm:$0xff]
    %v873 = vld [vmem:[%s8 + $0x38] sm:$0xff]
    %v874 = vperm.slane %v90, 0
    %vm875 = vcmask 523264
    %v877 = vsel %vm875, %v864, 0
    %v880 = vsel %vm875, %v865, 0
    %882 = vmatpush.msra.mxu0 0.0
    %883 = vmatpush.msra.mxu0 0.0
    %884 = vmatpush.msra.mxu0 0.0
    %885 = vmatpush.msra.mxu0 0.0
    %886 = vmatpush.msra.mxu0 0.0
    %887 = vmatpush.msra.mxu0 0.0
    %888 = vmatpush.msra.mxu0 0.0
    %889 = vmatpush.msra.mxu0 0.0
    %890 = vmatpush.msra.mxu0 %v873
    %891 = vmatpush.msra.mxu0 %v872
    %892 = vmatpush.msra.mxu0 %v871
    %893 = vmatpush.msra.mxu0 %v870
    %894 = vmatpush.msra.mxu0 %v869
    %895 = vmatpush.msra.mxu0 %v868
    %896 = vmatpush.msra.mxu0 %v867
    %897 = vmatpush.msra.mxu0 %v866
    %898 = vmatmul.f32.gmra.mxu0 %v877
    %v899 = vpop.f32.mrf.mxu0
    %v900 = vadd.f32 %v874, %v899
    %901 = vmatmul.f32.gmra.mxu0 %v880
    %v902 = vpop.f32.mrf.mxu0
    %v903 = vadd.f32 %v874, %v902
    %904 = vdwg.mxu0
    %v905 = vadd.f32 %v739, %v900
    %v906 = vadd.f32 %v740, %v903
    %v907 = vsel %vm141, %v905, 0.0
    %908 = vadd.xlane.f32.xlu0 %v907
    %v909 = vpop.xlane.xlu0 %908
    %v910 = vsel %vm141, %v906, 0.0
    %911 = vadd.xlane.f32.xlu0 %v910
    %v912 = vpop.xlane.xlu0 %911
    %v913 = vmul.f32 %v909, %v696
    %v914 = vmul.f32 %v912, %v696
    %v915 = vsub.f32 %v905, %v913
    %v916 = vsub.f32 %v906, %v914
    %v917 = vmul.f32 %v915, %v915
    %v918 = vmul.f32 %v916, %v916
    %v919 = vsel %vm141, %v917, 0.0
    %920 = vadd.xlane.f32.xlu0 %v919
    %v921 = vpop.xlane.xlu0 %920
    %v922 = vsel %vm141, %v918, 0.0
    %923 = vadd.xlane.f32.xlu0 %v922
    %v924 = vpop.xlane.xlu0 %923
    %v925 = vmul.f32 %v921, %v696
    %v926 = vmul.f32 %v924, %v696
    %v927 = vadd.f32 %v925, 1e-05
    %v928 = vadd.f32 %v926, 1e-05
    %v929 = vrsqrt.pop %v927
    %v930 = vmul.f32 %v929, %v927
    %v931 = vmul.f32 %v930, %v929
    %v932 = vmul.f32 0.5, %v931
    %v933 = vsub.f32 1.5, %v932
    %v934 = vmul.f32 %v929, %v933
    %vm935 = vweird.f32 %v927
    %vm936 = vweird.f32 %v929
    %vm937 = vmor %vm935, %vm936
    %v938 = vsel %vm937, %v929, %v934
    %v939 = vrsqrt.pop %v928
    %v940 = vmul.f32 %v939, %v928
    %v941 = vmul.f32 %v940, %v939
    %v942 = vmul.f32 0.5, %v941
    %v943 = vsub.f32 1.5, %v942
    %v944 = vmul.f32 %v939, %v943
    %vm945 = vweird.f32 %v928
    %vm946 = vweird.f32 %v939
    %vm947 = vmor %vm945, %vm946
    %v948 = vsel %vm947, %v939, %v944
    %v949 = vmul.f32 %v915, %v938
    %v950 = vmul.f32 %v916, %v948
    %v951 = vperm.slane %v91, 0
    %v952 = vmul.f32 %v949, %v951
    %v953 = vmul.f32 %v950, %v951
    %v954 = vperm.slane %v92, 0
    %v955 = vadd.f32 %v952, %v954
    %v956 = vadd.f32 %v953, %v954
    %957 = vst.msk [vmem:[#allocation8] sm:$0xff] %vm141, %v955
    %958 = vst.msk [vmem:[#allocation8 + $0x8] sm:$0xff] %vm141, %v956
    // Predicated region
    $region58: #{tpu_custom_call.1} parent=1 // pred_check
      _
    $region59: #{tpu_custom_call.1} parent=1 // pred_check_branch
      %960 = sbr.rel (0) target = $region61
    $region60: #{tpu_custom_call.1} parent=1 // pred_region
      %962 = vsyncadd [#allocation4], 0
      %s963 = sshll.u32 [#allocation8], 4
      %s964 = int_to_ptr.vmem [resolvable:$true] %s963
      %s965 = sshll.u32 %s11, 4
      %s966 = int_to_ptr.hbm [resolvable:$true] %s965
      %971 = dma.vmem_to_hbm [thread:$0]  %s964, 256, %s966, [#allocation4], 128, 128, 8
    $region61: #{tpu_custom_call.1} parent=1 // pred_fallthru
      _
    // Predicated region
    $region62: #{tpu_custom_call.1} parent=1 // pred_check
      _
    $region63: #{tpu_custom_call.1} parent=1 // pred_check_branch
      %973 = sbr.rel (0) target = $region65
    $region64: #{tpu_custom_call.1} parent=1 // pred_region
      %975 = dma.done [#allocation4], 256
    $region65: #{tpu_custom_call.1} parent=1 // pred_fallthru
      _
    %976 = vsyncpa [#allocation3], 1
    %977 = vsyncpa [#allocation6], 1
    %978 = vsyncpa [#allocation4], 1

</llo_original>
